<compile_context>
chip_gen: v6e
topology: v6e:2x2x1
jax: 0.10.0
libtpu: 0.0.40
codegen_flags: <defaults>
</compile_context>

<pallas_src>
import functools

import jax
import jax.numpy as jnp
from jax import lax
from jax.experimental import pallas as pl
from jax.experimental.pallas import tpu as pltpu


def _round_up(n, m):
    return ((n + m - 1) // m) * m


def _cdiv(n, m):
    return (n + m - 1) // m


def _tuning():
    """Per-generation (max tile rows, scoped VMEM limit, multi-TensorCore)."""
    try:
        kind = jax.devices()[0].device_kind.lower()
    except Exception:
        kind = ""
    if "v5 lite" in kind or "v5e" in kind or "v5lite" in kind:
        # v5e: 16 MiB default scoped VMEM -> raise it; 2048-row tiles already
        # amortize the ~0.35us grid-step overhead.
        return 2048, 48 << 20, False
    if "v7" in kind or "7x" in kind:
        # v7x: 64 MiB physical VMEM per TC, 2 TensorCores per chip.
        return 4096, 48 << 20, True
    # v6e (and other single-TC, 128 MiB VMEM parts).
    return 4096, 64 << 20, False


def _mlp_kernel(xs_ref, xt_ref, w1_ref, b1_ref, w2_ref, b2_ref, w3_ref, b3_ref,
                o_ref):
    # fc1: lane-concat the two activation halves in VMEM and run ONE K=32
    # bf16 MXU dot against the unsplit W1; accumulate in f32.
    x = jnp.concatenate([xs_ref[...], xt_ref[...]], axis=-1).astype(jnp.bfloat16)
    h1 = jnp.dot(x, w1_ref[...], preferred_element_type=jnp.float32)
    h1 = jnp.maximum(h1 + b1_ref[...], 0.0)

    # fc2 (+ ReLU): bf16 operands, f32 accumulation.
    h2 = jnp.dot(h1.astype(jnp.bfloat16), w2_ref[...],
                 preferred_element_type=jnp.float32)
    h2 = jnp.maximum(h2 + b2_ref[...], 0.0)

    # fc_out (64 -> 1), emitted lane-dense: for every 128-row slab compute
    # w3 (1,64) x slab^T (64,128) (contraction over both minor dims, the
    # standard q@k^T pattern) so the 128 per-row scalars land across lanes.
    # One unmasked (1,128) store per slab instead of ~tr/8 masked vst.msk.
    tr = h2.shape[0]
    b3 = b3_ref[0, 0]
    for gg in range(tr // 128):
        slab = h2[gg * 128:(gg + 1) * 128, :].astype(jnp.bfloat16)   # (128, 64)
        row = lax.dot_general(w3_ref[...], slab, (((1,), (1,)), ((), ())),
                              preferred_element_type=jnp.float32)    # (1, 128)
        o_ref[pl.ds(gg, 1), :] = (row + b3).astype(o_ref.dtype)


@functools.partial(jax.jit, static_argnames=("tile_rows",))
def cross_layer_interaction(spatial_output, temporal_output, params, *,
                            tile_rows=None):
    """Pallas implementation of CrossLayerInteraction.forward.

    spatial_output:  (..., spatial_out_channels)
    temporal_output: (..., temporal_out_channels)
    returns:         (..., 1)
    """
    w1, b1, w2, b2, w3, b3 = params
    s_ch = spatial_output.shape[-1]
    t_ch = temporal_output.shape[-1]
    assert w1.shape[0] == s_ch + t_ch
    lead_shape = spatial_output.shape[:-1]
    dtype = spatial_output.dtype

    xs = spatial_output.reshape(-1, s_ch)
    xt = temporal_output.reshape(-1, t_ch)
    n_rows = xs.shape[0]
    h1_dim = w1.shape[1]
    h2_dim = w2.shape[1]

    # MXU operands in bf16 (weights cast once here; activations in-kernel).
    w1_bf = w1.astype(jnp.bfloat16)
    w2_bf = w2.astype(jnp.bfloat16)
    w3_row = w3.reshape(1, h2_dim).astype(jnp.bfloat16)   # (1, 64)
    b3_s = b3.reshape(1, 1)                                # scalar -> SMEM
    # TODO(synk): on v7x an fp8 W1/W2 + fp8 activation path would double MXU
    # throughput again; skipped to keep a single numerically-safe code path.

    # ---- row tiling -------------------------------------------------------
    # No wrapper-side padding: the grid uses ragged last blocks and the
    # garbage rows are sliced off below.  Tiles are multiples of 128 rows so
    # the lane-dense output block stays aligned; multi-tile runs use
    # 1024-row-aligned tiles so the output block's sublane dim is 8-aligned.
    max_tr, vmem_limit, multi_tc = _tuning()
    tr_req = max_tr if tile_rows is None else max(128, min(int(tile_rows), max_tr))
    tr_cap = max(1024, (tr_req // 1024) * 1024)
    rows_128 = _round_up(n_rows, 128)

    if rows_128 <= tr_req:
        # Single tile, unless both v7x TensorCores can get >= 1024 rows each.
        want_tiles = 2 if (multi_tc and rows_128 >= 2 * 1024) else 1
    else:
        want_tiles = _cdiv(n_rows, tr_cap)
    if multi_tc and want_tiles > 1 and want_tiles % 2:
        want_tiles += 1                      # even work split across the 2 TCs

    if want_tiles == 1:
        tr = rows_128                        # output block == full output array
    else:
        tr = min(_round_up(_cdiv(n_rows, want_tiles), 1024), tr_cap)
    grid_steps = _cdiv(n_rows, tr)
    out_rows = _cdiv(n_rows, 128)            # lane-dense output rows

    out2d = pl.pallas_call(
        _mlp_kernel,
        out_shape=jax.ShapeDtypeStruct((out_rows, 128), dtype),
        grid=(grid_steps,),
        in_specs=[
            pl.BlockSpec((tr, s_ch), lambda i: (i, 0)),             # spatial rows
            pl.BlockSpec((tr, t_ch), lambda i: (i, 0)),             # temporal rows
            pl.BlockSpec((s_ch + t_ch, h1_dim), lambda i: (0, 0)),  # W1 (bf16)
            pl.BlockSpec((1, h1_dim), lambda i: (0, 0)),            # b1
            pl.BlockSpec((h1_dim, h2_dim), lambda i: (0, 0)),       # W2 (bf16)
            pl.BlockSpec((1, h2_dim), lambda i: (0, 0)),            # b2
            pl.BlockSpec((1, h2_dim), lambda i: (0, 0)),            # w3 row (bf16)
            pl.BlockSpec(memory_space=pltpu.MemorySpace.SMEM),      # b3 scalar
        ],
        out_specs=pl.BlockSpec((tr // 128, 128), lambda i: (i, 0)),
        compiler_params=pltpu.CompilerParams(
            dimension_semantics=("parallel",),
            vmem_limit_bytes=vmem_limit,
        ),
    )(xs, xt, w1_bf, b1, w2_bf, b2, w3_row, b3_s)

    out = out2d.reshape(-1)[:n_rows]
    return out.reshape(*lead_shape, 1)


def init_params(key, spatial_out_channels, temporal_out_channels,
                dtype=jnp.float32):
    """nn.Linear-style init, weights stored transposed to (in, out)."""
    d_in = spatial_out_channels + temporal_out_channels
    dims = [(d_in, 128), (128, 64), (64, 1)]
    params = []
    for fan_in, fan_out in dims:
        key, kw, kb = jax.random.split(key, 3)
        bound = 1.0 / (fan_in ** 0.5)
        w = jax.random.uniform(kw, (fan_in, fan_out), dtype, -bound, bound)
        b = jax.random.uniform(kb, (1, fan_out), dtype, -bound, bound)
        params += [w, b]
    return tuple(params)


def _reference(sp, tp, params):
    """True f32 reference (HIGHEST matmul precision)."""
    w1, b1, w2, b2, w3, b3 = params
    hp = lax.Precision.HIGHEST
    xc = jnp.concatenate([sp, tp], axis=-1)
    h = jnp.maximum(jnp.dot(xc, w1, precision=hp) + b1[0], 0.0)
    h = jnp.maximum(jnp.dot(h, w2, precision=hp) + b2[0], 0.0)
    return jnp.dot(h, w3, precision=hp) + b3[0]


def _reference_bf16(sp, tp, params):
    """Emulates the kernel's numerics: bf16 MXU operands, f32 accumulation."""
    w1, b1, w2, b2, w3, b3 = params
    xc = jnp.concatenate([sp, tp], axis=-1).astype(jnp.bfloat16)
    h = jnp.dot(xc, w1.astype(jnp.bfloat16), preferred_element_type=jnp.float32)
    h = jnp.maximum(h + b1[0], 0.0)
    h = jnp.dot(h.astype(jnp.bfloat16), w2.astype(jnp.bfloat16),
                preferred_element_type=jnp.float32)
    h = jnp.maximum(h + b2[0], 0.0)
    return jnp.dot(h.astype(jnp.bfloat16), w3.astype(jnp.bfloat16),
                   preferred_element_type=jnp.float32) + b3[0]


if __name__ == "__main__":
    key = jax.random.PRNGKey(0)
    k_param, k_sp, k_tp = jax.random.split(key, 3)

    batch, seq = 2, 8
    spatial_out_channels, temporal_out_channels = 16, 16

    params = init_params(k_param, spatial_out_channels, temporal_out_channels)

    spatial_output = jax.random.normal(
        k_sp, (batch, seq, spatial_out_channels), jnp.float32)
    temporal_output = jax.random.normal(
        k_tp, (batch, seq, temporal_out_channels), jnp.float32)

    out = cross_layer_interaction(spatial_output, temporal_output, params)
    jax.block_until_ready(out)

    ref = _reference(spatial_output, temporal_output, params)
    ref_bf = _reference_bf16(spatial_output, temporal_output, params)
    assert out.shape == (batch, seq, 1)
    # Loose check vs the true f32 reference (bf16 MXU operands), tight-ish
    # check vs a bf16-emulated reference.
    assert jnp.allclose(out, ref, atol=2e-2, rtol=2e-2)
    assert jnp.allclose(out, ref_bf, atol=2e-3, rtol=2e-3)

    # Row count not a multiple of 128: exercises the ragged last-block path
    # (no wrapper-side padding).
    k2s, k2t = jax.random.split(jax.random.PRNGKey(1))
    sp2 = jax.random.normal(k2s, (3, 7, spatial_out_channels), jnp.float32)
    tp2 = jax.random.normal(k2t, (3, 7, temporal_out_channels), jnp.float32)
    out2 = cross_layer_interaction(sp2, tp2, params)
    jax.block_until_ready(out2)
    ref2 = _reference(sp2, tp2, params)
    assert out2.shape == (3, 7, 1)
    assert jnp.allclose(out2, ref2, atol=2e-2, rtol=2e-2)

    print("KERNEL_OK")
</pallas_src>

<mosaic_0001>
module attributes {stable_mosaic.version = 11 : i64} {
  func.func @_mlp_kernel(%arg0: i32, %arg1: memref<128x16xf32, #tpu.memory_space<vmem>>, %arg2: memref<128x16xf32, #tpu.memory_space<vmem>>, %arg3: memref<32x128xbf16, #tpu.memory_space<vmem>>, %arg4: memref<1x128xf32, #tpu.memory_space<vmem>>, %arg5: memref<128x64xbf16, #tpu.memory_space<vmem>>, %arg6: memref<1x64xf32, #tpu.memory_space<vmem>>, %arg7: memref<1x64xbf16, #tpu.memory_space<vmem>>, %arg8: memref<1x1xf32, #tpu.memory_space<smem>>, %arg9: memref<1x128xf32, #tpu.memory_space<vmem>>) attributes {dimension_semantics = [#tpu.dimension_semantics<parallel>], iteration_bounds = array<i64: 1>, scalar_prefetch = 0 : i64, scratch_operands = 0 : i64, tpu.core_type = #tpu.core_type<tc>, window_params = [{transform_indices = @transform_0, window_bounds = array<i64: 128, 16>}, {transform_indices = @transform_1, window_bounds = array<i64: 128, 16>}, {pipeline_mode = #tpu.pipeline_mode<synchronous>, transform_indices = @transform_2, window_bounds = array<i64: 32, 128>}, {pipeline_mode = #tpu.pipeline_mode<synchronous>, transform_indices = @transform_3, window_bounds = array<i64: 1, 128>}, {pipeline_mode = #tpu.pipeline_mode<synchronous>, transform_indices = @transform_4, window_bounds = array<i64: 128, 64>}, {pipeline_mode = #tpu.pipeline_mode<synchronous>, transform_indices = @transform_5, window_bounds = array<i64: 1, 64>}, {pipeline_mode = #tpu.pipeline_mode<synchronous>, transform_indices = @transform_6, window_bounds = array<i64: 1, 64>}, {transform_indices = @transform_7, window_bounds = array<i64: 1, 1>}, {transform_indices = @transform_8, window_bounds = array<i64: 1, 128>}]} {
    %c0 = arith.constant 0 : index
    %c0_0 = arith.constant 0 : index
    %0 = vector.load %arg1[%c0, %c0_0] : memref<128x16xf32, #tpu.memory_space<vmem>>, vector<128x16xf32>
    %c0_1 = arith.constant 0 : index
    %c0_2 = arith.constant 0 : index
    %1 = vector.load %arg2[%c0_1, %c0_2] : memref<128x16xf32, #tpu.memory_space<vmem>>, vector<128x16xf32>
    %2 = tpu.concatenate %0, %1 in 1 : vector<128x16xf32>, vector<128x16xf32> -> vector<128x32xf32>
    %3 = arith.truncf %2 : vector<128x32xf32> to vector<128x32xbf16>
    %c0_3 = arith.constant 0 : index
    %c0_4 = arith.constant 0 : index
    %4 = vector.load %arg3[%c0_3, %c0_4] : memref<32x128xbf16, #tpu.memory_space<vmem>>, vector<32x128xbf16>
    %cst = arith.constant dense<0.000000e+00> : vector<128x128xf32>
    %5 = tpu.matmul %3, %4, %cst {dimension_numbers = #tpu.dot_dimension_numbers<[1], [0], [0], [1], [0, 0, 1, 1], [], []>} : vector<128x32xbf16>, vector<32x128xbf16>, vector<128x128xf32> -> vector<128x128xf32>
    %c0_5 = arith.constant 0 : index
    %c0_6 = arith.constant 0 : index
    %6 = vector.load %arg4[%c0_5, %c0_6] : memref<1x128xf32, #tpu.memory_space<vmem>>, vector<1x128xf32>
    %7 = vector.broadcast %6 : vector<1x128xf32> to vector<128x128xf32>
    %8 = arith.addf %5, %7 : vector<128x128xf32>
    %cst_7 = arith.constant 0.000000e+00 : f32
    %9 = vector.broadcast %cst_7 : f32 to vector<128x128xf32>
    %10 = arith.maximumf %8, %9 : vector<128x128xf32>
    %11 = arith.truncf %10 : vector<128x128xf32> to vector<128x128xbf16>
    %c0_8 = arith.constant 0 : index
    %c0_9 = arith.constant 0 : index
    %12 = vector.load %arg5[%c0_8, %c0_9] : memref<128x64xbf16, #tpu.memory_space<vmem>>, vector<128x64xbf16>
    %cst_10 = arith.constant dense<0.000000e+00> : vector<128x64xf32>
    %13 = tpu.matmul %11, %12, %cst_10 {dimension_numbers = #tpu.dot_dimension_numbers<[1], [0], [0], [1], [0, 0, 1, 1], [], []>} : vector<128x128xbf16>, vector<128x64xbf16>, vector<128x64xf32> -> vector<128x64xf32>
    %c0_11 = arith.constant 0 : index
    %c0_12 = arith.constant 0 : index
    %14 = vector.load %arg6[%c0_11, %c0_12] : memref<1x64xf32, #tpu.memory_space<vmem>>, vector<1x64xf32>
    %15 = vector.broadcast %14 : vector<1x64xf32> to vector<128x64xf32>
    %16 = arith.addf %13, %15 : vector<128x64xf32>
    %cst_13 = arith.constant 0.000000e+00 : f32
    %17 = vector.broadcast %cst_13 : f32 to vector<128x64xf32>
    %18 = arith.maximumf %16, %17 : vector<128x64xf32>
    %c0_14 = arith.constant 0 : index
    %c0_15 = arith.constant 0 : index
    %19 = memref.load %arg8[%c0_14, %c0_15] : memref<1x1xf32, #tpu.memory_space<smem>>
    %20 = arith.truncf %18 : vector<128x64xf32> to vector<128x64xbf16>
    %c0_16 = arith.constant 0 : index
    %c0_17 = arith.constant 0 : index
    %21 = vector.load %arg7[%c0_16, %c0_17] : memref<1x64xbf16, #tpu.memory_space<vmem>>, vector<1x64xbf16>
    %cst_18 = arith.constant dense<0.000000e+00> : vector<1x128xf32>
    %22 = tpu.matmul %21, %20, %cst_18 {dimension_numbers = #tpu.dot_dimension_numbers<[1], [1], [0], [0], [0, 0, 1, 0], [], []>} : vector<1x64xbf16>, vector<128x64xbf16>, vector<1x128xf32> -> vector<1x128xf32>
    %23 = vector.broadcast %19 : f32 to vector<1x128xf32>
    %24 = arith.addf %22, %23 : vector<1x128xf32>
    %c0_19 = arith.constant 0 : index
    %c0_20 = arith.constant 0 : index
    %25 = vector.load %arg9[%c0_19, %c0_20] : memref<1x128xf32, #tpu.memory_space<vmem>>, vector<1x128xf32>
    tpu.vector_store %arg9[%c0_19, %c0_20], %24 {strides = array<i32>} : memref<1x128xf32, #tpu.memory_space<vmem>>, vector<1x128xf32>,
    return
  }
  func.func @transform_0(%arg0: i32) -> (i32, i32) {
    %c0_i32 = arith.constant 0 : i32
    %c0_i32_0 = arith.constant 0 : i32
    return %arg0, %c0_i32 : i32, i32
  }
  func.func @transform_1(%arg0: i32) -> (i32, i32) {
    %c0_i32 = arith.constant 0 : i32
    %c0_i32_0 = arith.constant 0 : i32
    return %arg0, %c0_i32 : i32, i32
  }
  func.func @transform_2(%arg0: i32) -> (i32, i32) {
    %c0_i32 = arith.constant 0 : i32
    %c0_i32_0 = arith.constant 0 : i32
    %c0_i32_1 = arith.constant 0 : i32
    return %c0_i32, %c0_i32_0 : i32, i32
  }
  func.func @transform_3(%arg0: i32) -> (i32, i32) {
    %c0_i32 = arith.constant 0 : i32
    %c0_i32_0 = arith.constant 0 : i32
    %c0_i32_1 = arith.constant 0 : i32
    return %c0_i32, %c0_i32_0 : i32, i32
  }
  func.func @transform_4(%arg0: i32) -> (i32, i32) {
    %c0_i32 = arith.constant 0 : i32
    %c0_i32_0 = arith.constant 0 : i32
    %c0_i32_1 = arith.constant 0 : i32
    return %c0_i32, %c0_i32_0 : i32, i32
  }
  func.func @transform_5(%arg0: i32) -> (i32, i32) {
    %c0_i32 = arith.constant 0 : i32
    %c0_i32_0 = arith.constant 0 : i32
    %c0_i32_1 = arith.constant 0 : i32
    return %c0_i32, %c0_i32_0 : i32, i32
  }
  func.func @transform_6(%arg0: i32) -> (i32, i32) {
    %c0_i32 = arith.constant 0 : i32
    %c0_i32_0 = arith.constant 0 : i32
    %c0_i32_1 = arith.constant 0 : i32
    return %c0_i32, %c0_i32_0 : i32, i32
  }
  func.func @transform_7(%arg0: i32) -> (i32, i32) {
    %c0_i32 = arith.constant 0 : i32
    %c0_i32_0 = arith.constant 0 : i32
    %c0_i32_1 = arith.constant 0 : i32
    return %c0_i32, %c0_i32_0 : i32, i32
  }
  func.func @transform_8(%arg0: i32) -> (i32, i32) {
    %c0_i32 = arith.constant 0 : i32
    %c0_i32_0 = arith.constant 0 : i32
    return %arg0, %c0_i32 : i32, i32
  }
}

</mosaic_0001>

<llo_original>
// kernel: cross_layer_interaction.1
$region0: #{cross_layer_interaction.1}
  #allocation0 [shape = 'u32[]', space=smem, size = 0x4, offset = 0x4, fixed_abs, tag = 'smem constant byte address 0x4 - core index']
  #allocation1 [shape = 'u32[144,128]{1,0:T(1,128)}', space=vmem, size = 0x12000, scoped, tag = 'internal scratch']
  #allocation2 [shape = 'f32[1,1]{1,0:T(1,128)S(6)}', space=smem, size = 0x200, scoped, tag = 'scoped memory for cross_layer_interaction.1']
  %s0 = inlined_call_operand.vmem [shape: f32[16,16], index: 0, kind: input, shape index: {}]
  %s1 = inlined_call_operand.vmem [shape: f32[16,16], index: 1, kind: input, shape index: {}]
  %s2 = inlined_call_operand.vmem [shape: bf16[32,128], index: 2, kind: input, shape index: {}]
  %s3 = inlined_call_operand.vmem [shape: f32[1,128], index: 3, kind: input, shape index: {}]
  %s4 = inlined_call_operand.vmem [shape: bf16[128,64], index: 4, kind: input, shape index: {}]
  %s5 = inlined_call_operand.vmem [shape: f32[1,64], index: 5, kind: input, shape index: {}]
  %s6 = inlined_call_operand.vmem [shape: bf16[1,64], index: 6, kind: input, shape index: {}]
  %s7 = inlined_call_operand.<no memory space> [shape: f32[1,1], index: 7, kind: input, shape index: {}]
  %s8 = inlined_call_operand.vmem [shape: f32[1,128], index: 8, kind: output, shape index: {}]
  %s9 = sld [smem:[#allocation0]]
  $region42: #{cross_layer_interaction.1} parent=0
    _
  %s11 = ssub.s32 1, %s9
  %s12 = scalar_select 0, %s11, %s9
  %13 = sst [smem:[#allocation2]] %s7
  // Predicated region
  $region2: #{cross_layer_interaction.1} parent=0 // pred_check
    _
  $region3: #{cross_layer_interaction.1} parent=0 // pred_check_branch
    %15 = sbr.rel (0) target = $region5
  $region4: #{cross_layer_interaction.1} parent=0 // pred_region
    _
  $region5: #{cross_layer_interaction.1} parent=0 // pred_fallthru
    _
  // Predicated region
  $region6: #{cross_layer_interaction.1} parent=0 // pred_check
    _
  $region7: #{cross_layer_interaction.1} parent=0 // pred_check_branch
    %17 = sbr.rel (0) target = $region9
  $region8: #{cross_layer_interaction.1} parent=0 // pred_region
    _
  $region9: #{cross_layer_interaction.1} parent=0 // pred_fallthru
    _
  // Predicated region
  $region10: #{cross_layer_interaction.1} parent=0 // pred_check
    _
  $region11: #{cross_layer_interaction.1} parent=0 // pred_check_branch
    %19 = sbr.rel (0) target = $region13
  $region12: #{cross_layer_interaction.1} parent=0 // pred_region
    _
  $region13: #{cross_layer_interaction.1} parent=0 // pred_fallthru
    _
  // Predicated region
  $region14: #{cross_layer_interaction.1} parent=0 // pred_check
    _
  $region15: #{cross_layer_interaction.1} parent=0 // pred_check_branch
    %21 = sbr.rel (0) target = $region17
  $region16: #{cross_layer_interaction.1} parent=0 // pred_region
    _
  $region17: #{cross_layer_interaction.1} parent=0 // pred_fallthru
    _
  // Predicated region
  $region18: #{cross_layer_interaction.1} parent=0 // pred_check
    _
  $region19: #{cross_layer_interaction.1} parent=0 // pred_check_branch
    %23 = sbr.rel (0) target = $region21
  $region20: #{cross_layer_interaction.1} parent=0 // pred_region
    _
  $region21: #{cross_layer_interaction.1} parent=0 // pred_fallthru
    _
  // Predicated region
  $region22: #{cross_layer_interaction.1} parent=0 // pred_check
    _
  $region23: #{cross_layer_interaction.1} parent=0 // pred_check_branch
    %25 = sbr.rel (0) target = $region25
  $region24: #{cross_layer_interaction.1} parent=0 // pred_region
    _
  $region25: #{cross_layer_interaction.1} parent=0 // pred_fallthru
    _
  // Predicated region
  $region26: #{cross_layer_interaction.1} parent=0 // pred_check
    _
  $region27: #{cross_layer_interaction.1} parent=0 // pred_check_branch
    %27 = sbr.rel (0) target = $region29
  $region28: #{cross_layer_interaction.1} parent=0 // pred_region
    _
  $region29: #{cross_layer_interaction.1} parent=0 // pred_fallthru
    _
  // Predicated region
  $region30: #{cross_layer_interaction.1} parent=0 // pred_check
    _
  $region31: #{cross_layer_interaction.1} parent=0 // pred_check_branch
    %29 = sbr.rel (0) target = $region33
  $region32: #{cross_layer_interaction.1} parent=0 // pred_region
    _
  $region33: #{cross_layer_interaction.1} parent=0 // pred_fallthru
    _
  %v31 = vld [vmem:[%s0] sm:$0xff]
  %v32 = vld [vmem:[%s0 + $0x8] sm:$0xff]
  %v33 = vld [vmem:[%s0 + $0x10] sm:$0xff]
  %v34 = vld [vmem:[%s0 + $0x18] sm:$0xff]
  %v35 = vld [vmem:[%s0 + $0x20] sm:$0xff]
  %v36 = vld [vmem:[%s0 + $0x28] sm:$0xff]
  %v37 = vld [vmem:[%s0 + $0x30] sm:$0xff]
  %v38 = vld [vmem:[%s0 + $0x38] sm:$0xff]
  %v39 = vld [vmem:[%s0 + $0x40] sm:$0xff]
  %v40 = vld [vmem:[%s0 + $0x48] sm:$0xff]
  %v41 = vld [vmem:[%s0 + $0x50] sm:$0xff]
  %v42 = vld [vmem:[%s0 + $0x58] sm:$0xff]
  %v43 = vld [vmem:[%s0 + $0x60] sm:$0xff]
  %v44 = vld [vmem:[%s0 + $0x68] sm:$0xff]
  %v45 = vld [vmem:[%s0 + $0x70] sm:$0xff]
  %v46 = vld [vmem:[%s0 + $0x78] sm:$0xff]
  %v47 = vld [vmem:[%s1] sm:$0xff]
  %v48 = vld [vmem:[%s1 + $0x8] sm:$0xff]
  %v49 = vld [vmem:[%s1 + $0x10] sm:$0xff]
  %v50 = vld [vmem:[%s1 + $0x18] sm:$0xff]
  %v51 = vld [vmem:[%s1 + $0x20] sm:$0xff]
  %v52 = vld [vmem:[%s1 + $0x28] sm:$0xff]
  %v53 = vld [vmem:[%s1 + $0x30] sm:$0xff]
  %v54 = vld [vmem:[%s1 + $0x38] sm:$0xff]
  %v55 = vld [vmem:[%s1 + $0x40] sm:$0xff]
  %v56 = vld [vmem:[%s1 + $0x48] sm:$0xff]
  %v57 = vld [vmem:[%s1 + $0x50] sm:$0xff]
  %v58 = vld [vmem:[%s1 + $0x58] sm:$0xff]
  %v59 = vld [vmem:[%s1 + $0x60] sm:$0xff]
  %v60 = vld [vmem:[%s1 + $0x68] sm:$0xff]
  %v61 = vld [vmem:[%s1 + $0x70] sm:$0xff]
  %v62 = vld [vmem:[%s1 + $0x78] sm:$0xff]
  %79 = vrot.lane.b32.xlu0 %v47, 16
  %v80 = vpop.permute.xlu0 %79
  %81 = vrot.lane.b32.xlu0 %v48, 16
  %v82 = vpop.permute.xlu0 %81
  %83 = vrot.lane.b32.xlu0 %v49, 16
  %v84 = vpop.permute.xlu0 %83
  %85 = vrot.lane.b32.xlu0 %v50, 16
  %v86 = vpop.permute.xlu0 %85
  %87 = vrot.lane.b32.xlu0 %v51, 16
  %v88 = vpop.permute.xlu0 %87
  %89 = vrot.lane.b32.xlu0 %v52, 16
  %v90 = vpop.permute.xlu0 %89
  %91 = vrot.lane.b32.xlu0 %v53, 16
  %v92 = vpop.permute.xlu0 %91
  %93 = vrot.lane.b32.xlu0 %v54, 16
  %v94 = vpop.permute.xlu0 %93
  %95 = vrot.lane.b32.xlu0 %v55, 16
  %v96 = vpop.permute.xlu0 %95
  %97 = vrot.lane.b32.xlu0 %v56, 16
  %v98 = vpop.permute.xlu0 %97
  %99 = vrot.lane.b32.xlu0 %v57, 16
  %v100 = vpop.permute.xlu0 %99
  %101 = vrot.lane.b32.xlu0 %v58, 16
  %v102 = vpop.permute.xlu0 %101
  %103 = vrot.lane.b32.xlu0 %v59, 16
  %v104 = vpop.permute.xlu0 %103
  %105 = vrot.lane.b32.xlu0 %v60, 16
  %v106 = vpop.permute.xlu0 %105
  %107 = vrot.lane.b32.xlu0 %v61, 16
  %v108 = vpop.permute.xlu0 %107
  %109 = vrot.lane.b32.xlu0 %v62, 16
  %v110 = vpop.permute.xlu0 %109
  %vm127 = vcmask 130048
  %v128 = vsel %vm127, %v31, %v80
  %v129 = vsel %vm127, %v32, %v82
  %v130 = vsel %vm127, %v33, %v84
  %v131 = vsel %vm127, %v34, %v86
  %v132 = vsel %vm127, %v35, %v88
  %v133 = vsel %vm127, %v36, %v90
  %v134 = vsel %vm127, %v37, %v92
  %v135 = vsel %vm127, %v38, %v94
  %v136 = vsel %vm127, %v39, %v96
  %v137 = vsel %vm127, %v40, %v98
  %v138 = vsel %vm127, %v41, %v100
  %v139 = vsel %vm127, %v42, %v102
  %v140 = vsel %vm127, %v43, %v104
  %v141 = vsel %vm127, %v44, %v106
  %v142 = vsel %vm127, %v45, %v108
  %v143 = vsel %vm127, %v46, %v110
  %v144 = vpack.c.bf16 %v129, %v128
  %v145 = vpack.c.bf16 %v131, %v130
  %v146 = vpack.c.bf16 %v133, %v132
  %v147 = vpack.c.bf16 %v135, %v134
  %v148 = vpack.c.bf16 %v137, %v136
  %v149 = vpack.c.bf16 %v139, %v138
  %v150 = vpack.c.bf16 %v141, %v140
  %v151 = vpack.c.bf16 %v143, %v142
  %v152 = vld [vmem:[%s2] sm:$0xf]
  %v153 = vld [vmem:[%s2 + $0x4] sm:$0xf]
  %v154 = vld [vmem:[%s2 + $0x8] sm:$0xf]
  %v155 = vld [vmem:[%s2 + $0xc] sm:$0xf]
  %v156 = vld [vmem:[%s3] sm:$0x1]
  %v158 = vlaneseq
  %v159 = vshrl.u32 %v158, 7
  %v160 = vsub.s32 0, %v159
  %v161 = vrot.slane %v156, %v160
  %v167 = vunpack.c.l.b16 %v152
  %v168 = vunpack.c.l.b16 %v153
  %v169 = vunpack.c.l.b16 %v154
  %v170 = vunpack.c.l.b16 %v155
  %v171 = vpack.c.b16 %v168, %v167
  %v172 = vpack.c.b16 %v170, %v169
  %vm175 = vcmask 261120
  %v177 = vsel %vm175, %v144, 0
  %v180 = vsel %vm175, %v145, 0
  %v183 = vsel %vm175, %v146, 0
  %v186 = vsel %vm175, %v147, 0
  %v189 = vsel %vm175, %v148, 0
  %v192 = vsel %vm175, %v149, 0
  %v195 = vsel %vm175, %v150, 0
  %v198 = vsel %vm175, %v151, 0
  %200 = vmatprep.subr.bf16.mxu0 0
  %201 = vmatpush1.bf16.msra.mxu0 0
  %202 = vmatprep.subr.bf16.mxu0 0
  %203 = vmatpush1.bf16.msra.mxu0 0
  %204 = vmatprep.subr.bf16.mxu0 0
  %205 = vmatpush1.bf16.msra.mxu0 0
  %206 = vmatprep.subr.bf16.mxu0 0
  %207 = vmatpush1.bf16.msra.mxu0 0
  %208 = vmatprep.subr.bf16.mxu0 0
  %209 = vmatpush1.bf16.msra.mxu0 0
  %210 = vmatprep.subr.bf16.mxu0 0
  %211 = vmatpush1.bf16.msra.mxu0 0
  %212 = vmatprep.subr.bf16.mxu0 0
  %213 = vmatpush1.bf16.msra.mxu0 %v172
  %214 = vmatprep.subr.bf16.mxu0 0
  %215 = vmatpush1.bf16.msra.mxu0 %v171
  %216 = vmatprep.subr.bf16.mxu0 0
  %217 = vmatpush2.bf16.msra.mxu0 0
  %218 = vmatprep.subr.bf16.mxu0 0
  %219 = vmatpush2.bf16.msra.mxu0 0
  %220 = vmatprep.subr.bf16.mxu0 0
  %221 = vmatpush2.bf16.msra.mxu0 0
  %222 = vmatprep.subr.bf16.mxu0 0
  %223 = vmatpush2.bf16.msra.mxu0 0
  %224 = vmatprep.subr.bf16.mxu0 0
  %225 = vmatpush2.bf16.msra.mxu0 0
  %226 = vmatprep.subr.bf16.mxu0 0
  %227 = vmatpush2.bf16.msra.mxu0 0
  %228 = vmatprep.subr.bf16.mxu0 0
  %229 = vmatpush2.bf16.msra.mxu0 0
  %230 = vmatprep.subr.bf16.mxu0 0
  %231 = vmatpush2.bf16.msra.mxu0 0
  %232 = vmatprep.mubr.bf16.mxu0 0
  %233 = vmatmul.mubr.bf16.gmra.mxu0 %v177
  %v234 = vpop.f32.mrf.mxu0
  %v235 = vadd.f32 %v161, %v234
  %v236 = vpop.f32.mrf.mxu0
  %v237 = vpop.f32.mrf.mxu0
  %v238 = vadd.f32 %v161, %v237
  %v239 = vpop.f32.mrf.mxu0
  %240 = vmatprep.mubr.bf16.mxu0 0
  %241 = vmatmul.mubr.bf16.gmra.mxu0 %v180
  %v242 = vpop.f32.mrf.mxu0
  %v243 = vadd.f32 %v161, %v242
  %v244 = vpop.f32.mrf.mxu0
  %v245 = vpop.f32.mrf.mxu0
  %v246 = vadd.f32 %v161, %v245
  %v247 = vpop.f32.mrf.mxu0
  %248 = vmatprep.mubr.bf16.mxu0 0
  %249 = vmatmul.mubr.bf16.gmra.mxu0 %v183
  %v250 = vpop.f32.mrf.mxu0
  %v251 = vadd.f32 %v161, %v250
  %v252 = vpop.f32.mrf.mxu0
  %v253 = vpop.f32.mrf.mxu0
  %v254 = vadd.f32 %v161, %v253
  %v255 = vpop.f32.mrf.mxu0
  %256 = vmatprep.mubr.bf16.mxu0 0
  %257 = vmatmul.mubr.bf16.gmra.mxu0 %v186
  %v258 = vpop.f32.mrf.mxu0
  %v259 = vadd.f32 %v161, %v258
  %v260 = vpop.f32.mrf.mxu0
  %v261 = vpop.f32.mrf.mxu0
  %v262 = vadd.f32 %v161, %v261
  %v263 = vpop.f32.mrf.mxu0
  %264 = vmatprep.mubr.bf16.mxu0 0
  %265 = vmatmul.mubr.bf16.gmra.mxu0 %v189
  %v266 = vpop.f32.mrf.mxu0
  %v267 = vadd.f32 %v161, %v266
  %v268 = vpop.f32.mrf.mxu0
  %v269 = vpop.f32.mrf.mxu0
  %v270 = vadd.f32 %v161, %v269
  %v271 = vpop.f32.mrf.mxu0
  %272 = vmatprep.mubr.bf16.mxu0 0
  %273 = vmatmul.mubr.bf16.gmra.mxu0 %v192
  %v274 = vpop.f32.mrf.mxu0
  %v275 = vadd.f32 %v161, %v274
  %v276 = vpop.f32.mrf.mxu0
  %v277 = vpop.f32.mrf.mxu0
  %v278 = vadd.f32 %v161, %v277
  %v279 = vpop.f32.mrf.mxu0
  %280 = vmatprep.mubr.bf16.mxu0 0
  %281 = vmatmul.mubr.bf16.gmra.mxu0 %v195
  %v282 = vpop.f32.mrf.mxu0
  %v283 = vadd.f32 %v161, %v282
  %v284 = vpop.f32.mrf.mxu0
  %v285 = vpop.f32.mrf.mxu0
  %v286 = vadd.f32 %v161, %v285
  %v287 = vpop.f32.mrf.mxu0
  %288 = vmatprep.mubr.bf16.mxu0 0
  %289 = vmatmul.mubr.bf16.gmra.mxu0 %v198
  %v290 = vpop.f32.mrf.mxu0
  %v291 = vadd.f32 %v161, %v290
  %v292 = vpop.f32.mrf.mxu0
  %v293 = vpop.f32.mrf.mxu0
  %v294 = vadd.f32 %v161, %v293
  %v295 = vpop.f32.mrf.mxu0
  %296 = vdwg.mxu0
  %v297 = vmax.f32 %v235, 0.0
  %v298 = vmax.f32 %v238, 0.0
  %v299 = vmax.f32 %v243, 0.0
  %v300 = vmax.f32 %v246, 0.0
  %v301 = vmax.f32 %v251, 0.0
  %v302 = vmax.f32 %v254, 0.0
  %v303 = vmax.f32 %v259, 0.0
  %v304 = vmax.f32 %v262, 0.0
  %v305 = vmax.f32 %v267, 0.0
  %v306 = vmax.f32 %v270, 0.0
  %v307 = vmax.f32 %v275, 0.0
  %v308 = vmax.f32 %v278, 0.0
  %v309 = vmax.f32 %v283, 0.0
  %v310 = vmax.f32 %v286, 0.0
  %v311 = vmax.f32 %v291, 0.0
  %v312 = vmax.f32 %v294, 0.0
  %v313 = vpack.c.bf16 %v298, %v297
  %v314 = vpack.c.bf16 %v300, %v299
  %v315 = vpack.c.bf16 %v302, %v301
  %v316 = vpack.c.bf16 %v304, %v303
  %v317 = vpack.c.bf16 %v306, %v305
  %v318 = vpack.c.bf16 %v308, %v307
  %v319 = vpack.c.bf16 %v310, %v309
  %v320 = vpack.c.bf16 %v312, %v311
  %v321 = vld [vmem:[%s4] sm:$0xf]
  %v322 = vld [vmem:[%s4 + $0x4] sm:$0xf]
  %v323 = vld [vmem:[%s4 + $0x8] sm:$0xf]
  %v324 = vld [vmem:[%s4 + $0xc] sm:$0xf]
  %v325 = vld [vmem:[%s4 + $0x10] sm:$0xf]
  %v326 = vld [vmem:[%s4 + $0x14] sm:$0xf]
  %v327 = vld [vmem:[%s4 + $0x18] sm:$0xf]
  %v328 = vld [vmem:[%s4 + $0x1c] sm:$0xf]
  %v329 = vld [vmem:[%s4 + $0x20] sm:$0xf]
  %v330 = vld [vmem:[%s4 + $0x24] sm:$0xf]
  %v331 = vld [vmem:[%s4 + $0x28] sm:$0xf]
  %v332 = vld [vmem:[%s4 + $0x2c] sm:$0xf]
  %v333 = vld [vmem:[%s4 + $0x30] sm:$0xf]
  %v334 = vld [vmem:[%s4 + $0x34] sm:$0xf]
  %v335 = vld [vmem:[%s4 + $0x38] sm:$0xf]
  %v336 = vld [vmem:[%s4 + $0x3c] sm:$0xf]
  %v337 = vld [vmem:[%s5] sm:$0x1]
  %v339 = vlaneseq
  %v340 = vshrl.u32 %v339, 7
  %v341 = vsub.s32 0, %v340
  %v342 = vrot.slane %v337, %v341
  %v360 = vunpack.c.l.b16 %v321
  %v361 = vunpack.c.l.b16 %v322
  %v362 = vunpack.c.l.b16 %v323
  %v363 = vunpack.c.l.b16 %v324
  %v364 = vunpack.c.l.b16 %v325
  %v365 = vunpack.c.l.b16 %v326
  %v366 = vunpack.c.l.b16 %v327
  %v367 = vunpack.c.l.b16 %v328
  %v368 = vunpack.c.l.b16 %v329
  %v369 = vunpack.c.l.b16 %v330
  %v370 = vunpack.c.l.b16 %v331
  %v371 = vunpack.c.l.b16 %v332
  %v372 = vunpack.c.l.b16 %v333
  %v373 = vunpack.c.l.b16 %v334
  %v374 = vunpack.c.l.b16 %v335
  %v375 = vunpack.c.l.b16 %v336
  %v376 = vpack.c.b16 %v361, %v360
  %v377 = vpack.c.b16 %v363, %v362
  %v378 = vpack.c.b16 %v365, %v364
  %v379 = vpack.c.b16 %v367, %v366
  %v380 = vpack.c.b16 %v369, %v368
  %v381 = vpack.c.b16 %v371, %v370
  %v382 = vpack.c.b16 %v373, %v372
  %v383 = vpack.c.b16 %v375, %v374
  %392 = vmatprep.subr.bf16.mxu0 0
  %393 = vmatpush1.bf16.msra.mxu0 %v383
  %394 = vmatprep.subr.bf16.mxu0 0
  %395 = vmatpush1.bf16.msra.mxu0 %v382
  %396 = vmatprep.subr.bf16.mxu0 0
  %397 = vmatpush1.bf16.msra.mxu0 %v381
  %398 = vmatprep.subr.bf16.mxu0 0
  %399 = vmatpush1.bf16.msra.mxu0 %v380
  %400 = vmatprep.subr.bf16.mxu0 0
  %401 = vmatpush1.bf16.msra.mxu0 %v379
  %402 = vmatprep.subr.bf16.mxu0 0
  %403 = vmatpush1.bf16.msra.mxu0 %v378
  %404 = vmatprep.subr.bf16.mxu0 0
  %405 = vmatpush1.bf16.msra.mxu0 %v377
  %406 = vmatprep.subr.bf16.mxu0 0
  %407 = vmatpush1.bf16.msra.mxu0 %v376
  %408 = vmatprep.subr.bf16.mxu0 0
  %409 = vmatpush2.bf16.msra.mxu0 0
  %410 = vmatprep.subr.bf16.mxu0 0
  %411 = vmatpush2.bf16.msra.mxu0 0
  %412 = vmatprep.subr.bf16.mxu0 0
  %413 = vmatpush2.bf16.msra.mxu0 0
  %414 = vmatprep.subr.bf16.mxu0 0
  %415 = vmatpush2.bf16.msra.mxu0 0
  %416 = vmatprep.subr.bf16.mxu0 0
  %417 = vmatpush2.bf16.msra.mxu0 0
  %418 = vmatprep.subr.bf16.mxu0 0
  %419 = vmatpush2.bf16.msra.mxu0 0
  %420 = vmatprep.subr.bf16.mxu0 0
  %421 = vmatpush2.bf16.msra.mxu0 0
  %422 = vmatprep.subr.bf16.mxu0 0
  %423 = vmatpush2.bf16.msra.mxu0 0
  %424 = vmatprep.mubr.bf16.mxu0 0
  %425 = vmatmul.mubr.bf16.gmra.mxu0 %v313
  %v426 = vpop.f32.mrf.mxu0
  %v427 = vadd.f32 %v342, %v426
  %v428 = vpop.f32.mrf.mxu0
  %v429 = vpop.f32.mrf.mxu0
  %v430 = vadd.f32 %v342, %v429
  %v431 = vpop.f32.mrf.mxu0
  %432 = vmatprep.mubr.bf16.mxu0 0
  %433 = vmatmul.mubr.bf16.gmra.mxu0 %v314
  %v434 = vpop.f32.mrf.mxu0
  %v435 = vadd.f32 %v342, %v434
  %v436 = vpop.f32.mrf.mxu0
  %v437 = vpop.f32.mrf.mxu0
  %v438 = vadd.f32 %v342, %v437
  %v439 = vpop.f32.mrf.mxu0
  %440 = vmatprep.mubr.bf16.mxu0 0
  %441 = vmatmul.mubr.bf16.gmra.mxu0 %v315
  %v442 = vpop.f32.mrf.mxu0
  %v443 = vadd.f32 %v342, %v442
  %v444 = vpop.f32.mrf.mxu0
  %v445 = vpop.f32.mrf.mxu0
  %v446 = vadd.f32 %v342, %v445
  %v447 = vpop.f32.mrf.mxu0
  %448 = vmatprep.mubr.bf16.mxu0 0
  %449 = vmatmul.mubr.bf16.gmra.mxu0 %v316
  %v450 = vpop.f32.mrf.mxu0
  %v451 = vadd.f32 %v342, %v450
  %v452 = vpop.f32.mrf.mxu0
  %v453 = vpop.f32.mrf.mxu0
  %v454 = vadd.f32 %v342, %v453
  %v455 = vpop.f32.mrf.mxu0
  %456 = vmatprep.mubr.bf16.mxu0 0
  %457 = vmatmul.mubr.bf16.gmra.mxu0 %v317
  %v458 = vpop.f32.mrf.mxu0
  %v459 = vadd.f32 %v342, %v458
  %v460 = vpop.f32.mrf.mxu0
  %v461 = vpop.f32.mrf.mxu0
  %v462 = vadd.f32 %v342, %v461
  %v463 = vpop.f32.mrf.mxu0
  %464 = vmatprep.mubr.bf16.mxu0 0
  %465 = vmatmul.mubr.bf16.gmra.mxu0 %v318
  %v466 = vpop.f32.mrf.mxu0
  %v467 = vadd.f32 %v342, %v466
  %v468 = vpop.f32.mrf.mxu0
  %v469 = vpop.f32.mrf.mxu0
  %v470 = vadd.f32 %v342, %v469
  %v471 = vpop.f32.mrf.mxu0
  %472 = vmatprep.mubr.bf16.mxu0 0
  %473 = vmatmul.mubr.bf16.gmra.mxu0 %v319
  %v474 = vpop.f32.mrf.mxu0
  %v475 = vadd.f32 %v342, %v474
  %v476 = vpop.f32.mrf.mxu0
  %v477 = vpop.f32.mrf.mxu0
  %v478 = vadd.f32 %v342, %v477
  %v479 = vpop.f32.mrf.mxu0
  %480 = vmatprep.mubr.bf16.mxu0 0
  %481 = vmatmul.mubr.bf16.gmra.mxu0 %v320
  %v482 = vpop.f32.mrf.mxu0
  %v483 = vadd.f32 %v342, %v482
  %v484 = vpop.f32.mrf.mxu0
  %v485 = vpop.f32.mrf.mxu0
  %v486 = vadd.f32 %v342, %v485
  %v487 = vpop.f32.mrf.mxu0
  %488 = vdwg.mxu0
  %v489 = vmax.f32 %v427, 0.0
  %v490 = vmax.f32 %v430, 0.0
  %v491 = vmax.f32 %v435, 0.0
  %v492 = vmax.f32 %v438, 0.0
  %v493 = vmax.f32 %v443, 0.0
  %v494 = vmax.f32 %v446, 0.0
  %v495 = vmax.f32 %v451, 0.0
  %v496 = vmax.f32 %v454, 0.0
  %v497 = vmax.f32 %v459, 0.0
  %v498 = vmax.f32 %v462, 0.0
  %v499 = vmax.f32 %v467, 0.0
  %v500 = vmax.f32 %v470, 0.0
  %v501 = vmax.f32 %v475, 0.0
  %v502 = vmax.f32 %v478, 0.0
  %v503 = vmax.f32 %v483, 0.0
  %v504 = vmax.f32 %v486, 0.0
  %s505 = sld [smem:[#allocation2]]
  %v506 = vpack.c.bf16 %v490, %v489
  %v507 = vpack.c.bf16 %v492, %v491
  %v508 = vpack.c.bf16 %v494, %v493
  %v509 = vpack.c.bf16 %v496, %v495
  %v510 = vpack.c.bf16 %v498, %v497
  %v511 = vpack.c.bf16 %v500, %v499
  %v512 = vpack.c.bf16 %v502, %v501
  %v513 = vpack.c.bf16 %v504, %v503
  %v514 = vld [vmem:[%s6] sm:$0x1]
  %v515 = vstv %s505
  %vm516 = vcmask 523264
  %v518 = vsel %vm516, %v514, 0
  %v521 = vsel %vm516, %v506, 0
  %v524 = vsel %vm516, %v507, 0
  %v527 = vsel %vm516, %v508, 0
  %v530 = vsel %vm516, %v509, 0
  %v533 = vsel %vm516, %v510, 0
  %v536 = vsel %vm516, %v511, 0
  %v539 = vsel %vm516, %v512, 0
  %v542 = vsel %vm516, %v513, 0
  %544 = vmatprep.subr.bf16.mxu0 0
  %545 = vmatpush1.bf16.xpose.msra.mxu0 %v542
  %546 = vmatprep.subr.bf16.mxu0 0
  %547 = vmatpush1.bf16.xpose.msra.mxu0 %v539
  %548 = vmatprep.subr.bf16.mxu0 0
  %549 = vmatpush1.bf16.xpose.msra.mxu0 %v536
  %550 = vmatprep.subr.bf16.mxu0 0
  %551 = vmatpush1.bf16.xpose.msra.mxu0 %v533
  %552 = vmatprep.subr.bf16.mxu0 0
  %553 = vmatpush1.bf16.xpose.msra.mxu0 %v530
  %554 = vmatprep.subr.bf16.mxu0 0
  %555 = vmatpush1.bf16.xpose.msra.mxu0 %v527
  %556 = vmatprep.subr.bf16.mxu0 0
  %557 = vmatpush1.bf16.xpose.msra.mxu0 %v524
  %558 = vmatprep.subr.bf16.mxu0 0
  %559 = vmatpush1.bf16.xpose.msra.mxu0 %v521
  %560 = vmatprep.subr.bf16.mxu0 0
  %561 = vmatpush2.bf16.xpose.msra.mxu0 0
  %562 = vmatprep.subr.bf16.mxu0 0
  %563 = vmatpush2.bf16.xpose.msra.mxu0 0
  %564 = vmatprep.subr.bf16.mxu0 0
  %565 = vmatpush2.bf16.xpose.msra.mxu0 0
  %566 = vmatprep.subr.bf16.mxu0 0
  %567 = vmatpush2.bf16.xpose.msra.mxu0 0
  %568 = vmatprep.subr.bf16.mxu0 0
  %569 = vmatpush2.bf16.xpose.msra.mxu0 0
  %570 = vmatprep.subr.bf16.mxu0 0
  %571 = vmatpush2.bf16.xpose.msra.mxu0 0
  %572 = vmatprep.subr.bf16.mxu0 0
  %573 = vmatpush2.bf16.xpose.msra.mxu0 0
  %574 = vmatprep.subr.bf16.mxu0 0
  %575 = vmatpush2.bf16.xpose.msra.mxu0 0
  %576 = vmatprep.mubr.bf16.mxu0 0
  %577 = vmatmul.mubr.bf16.gmra.mxu0 %v518
  %v578 = vpop.f32.mrf.mxu0
  %v579 = vadd.f32 %v515, %v578
  %v580 = vpop.f32.mrf.mxu0
  %v581 = vpop.f32.mrf.mxu0
  %v582 = vpop.f32.mrf.mxu0
  %583 = vdwg.mxu0
  %584 = vst [vmem:[%s8] sm:$0x1] %v579
  // Predicated region
  $region34: #{cross_layer_interaction.1} parent=0 // pred_check
    _
  $region35: #{cross_layer_interaction.1} parent=0 // pred_check_branch
    %586 = sbr.rel (0) target = $region37
  $region36: #{cross_layer_interaction.1} parent=0 // pred_region
    _
  $region37: #{cross_layer_interaction.1} parent=0 // pred_fallthru
    _
  // Predicated region
  $region38: #{cross_layer_interaction.1} parent=0 // pred_check
    _
  $region39: #{cross_layer_interaction.1} parent=0 // pred_check_branch
    %588 = sbr.rel (0) target = $region41
  $region40: #{cross_layer_interaction.1} parent=0 // pred_region
    _
  $region41: #{cross_layer_interaction.1} parent=0 // pred_fallthru
    _

</llo_original>
